<compile_context>
chip_gen: v5e
topology: v5e:2x2
jax: 0.10.0
libtpu: 0.0.40
codegen_flags: <defaults>
</compile_context>

<pallas_src>
import functools

import jax
import jax.numpy as jnp
from jax.experimental import pallas as pl
from jax.experimental.pallas import tpu as pltpu

_LANES = 128


def _vmem_capacity_bytes():
    """Physical VMEM capacity of the current TPU generation (conservative fallback)."""
    try:
        cap = int(pltpu.get_tpu_info().vmem_capacity_bytes)
        if cap > 0:
            return cap
    except Exception:
        pass
    return 64 << 20  # v7x per-TC VMEM (smallest of the targeted generations)


def _sublane_pack(dtype):
    """Native sublane packing for a dtype (rows per 32-bit sublane group)."""
    return {4: 8, 2: 16, 1: 32}.get(jnp.dtype(dtype).itemsize, 8)


def _round_up(x, m):
    return ((x + m - 1) // m) * m


def _choose_width(n):
    """Widest lane-dense last dim (multiple of 128) that divides n."""
    for w in (8192, 4096, 2048, 1024, 512, 256, 128):
        if n % w == 0:
            return w
    return _LANES  # unreachable: n is always a multiple of 128 here


def _binarize_kernel(x_ref, o_ref, *, threshold):
    # x_ref: (block_rows, width) tile in the input's native dtype.
    # o_ref: (block_rows, width) float32 tile.
    o_ref[...] = (x_ref[...] > threshold).astype(o_ref.dtype)


@functools.partial(jax.jit, static_argnames=("threshold",))
def _binarize_aligned(x2d, *, threshold):
    """Kernel launch on a lane-dense (rows, width) slab; width % 128 == 0."""
    rows, width = x2d.shape
    in_itemsize = jnp.dtype(x2d.dtype).itemsize
    pack = max(_sublane_pack(x2d.dtype), 8)  # output is f32 -> at least 8

    vmem_cap = _vmem_capacity_bytes()
    # ~4 MiB of f32 output per step, shrunk if the generation's VMEM is small.
    target_out_bytes = min(4 << 20, vmem_cap // 16)
    target_rows = max(pack, ((target_out_bytes // 4) // width) // pack * pack)

    # Keep >= ~8 grid steps when the input is big enough: pipelining + v7x 2-TC split.
    min_steps_rows = _round_up(-(-rows // 8), pack)
    block_rows = max(pack, min(target_rows, min_steps_rows))
    if block_rows >= rows:
        block_rows = rows  # full-extent leading dim is always a legal block shape

    grid = (-(-rows // block_rows),)  # ragged last row-block is masked by Pallas

    # Double-buffered in + out footprint; raise the scoped-VMEM limit accordingly
    # (v5e default is 16 MiB) while staying well under physical VMEM (64 MiB on v7x).
    block_in_bytes = block_rows * width * in_itemsize
    block_out_bytes = block_rows * width * 4
    footprint = 2 * (block_in_bytes + block_out_bytes)
    vmem_limit = max(footprint + (8 << 20), 32 << 20)
    vmem_limit = min(vmem_limit, max(footprint + (2 << 20), vmem_cap - (8 << 20)))

    n_elems = rows * width
    kernel = functools.partial(_binarize_kernel, threshold=threshold)

    return pl.pallas_call(
        kernel,
        out_shape=jax.ShapeDtypeStruct((rows, width), jnp.float32),
        grid_spec=pltpu.PrefetchScalarGridSpec(
            num_scalar_prefetch=0,
            grid=grid,
            in_specs=[pl.BlockSpec((block_rows, width), lambda i: (i, 0))],
            out_specs=pl.BlockSpec((block_rows, width), lambda i: (i, 0)),
        ),
        compiler_params=pltpu.CompilerParams(
            dimension_semantics=("parallel",),
            vmem_limit_bytes=int(vmem_limit),
        ),
        cost_estimate=pl.CostEstimate(
            flops=n_elems,
            transcendentals=0,
            bytes_accessed=n_elems * (in_itemsize + 4),
        ),
    )(x2d)


def _binarize_impl(x, threshold):
    """Forward: (x > threshold) -> float32, same shape as x."""
    orig_shape = x.shape
    n = x.size
    if n == 0:
        return jnp.zeros(orig_shape, jnp.float32)

    xf = x.reshape(-1)
    n_aligned = (n // _LANES) * _LANES
    rem = n - n_aligned

    if n_aligned == 0:
        # Fewer than 128 elements: not worth a kernel launch.
        return (xf > threshold).astype(jnp.float32).reshape(orig_shape)

    width = _choose_width(n_aligned)
    prefix = xf[:n_aligned] if rem else xf
    x2d = prefix.reshape(n_aligned // width, width)
    out_aligned = _binarize_aligned(x2d, threshold=threshold).reshape(-1)

    if rem:
        # <128-element tail: trivial XLA compare instead of a full pad/slice pass.
        tail = (xf[n_aligned:] > threshold).astype(jnp.float32)
        out_flat = jnp.concatenate([out_aligned, tail])
    else:
        out_flat = out_aligned
    return out_flat.reshape(orig_shape)


@functools.partial(jax.custom_vjp, nondiff_argnums=(1,))
def _binarize_ste(x, threshold):
    return _binarize_impl(x, threshold)


def _binarize_ste_fwd(x, threshold):
    # Residual only carries the input dtype (zero-size info) for the backward cast.
    return _binarize_impl(x, threshold), jnp.zeros((), x.dtype)


def _binarize_ste_bwd(threshold, dtype_token, g):
    # Straight-through estimator: grad_inputs = grad_output (deepsvg binarize_fun.backward).
    return (g.astype(dtype_token.dtype),)


_binarize_ste.defvjp(_binarize_ste_fwd, _binarize_ste_bwd)


def binarize(x, threshold=0.5):
    """Elementwise (x > threshold) -> float32 with straight-through backward."""
    return _binarize_ste(x, float(threshold))


class Binarize:
    """Drop-in equivalent of deepsvg's Binarize nn.Module (forward pass)."""

    def __init__(self, threshold=0.5):
        self.threshold = float(threshold)

    def __call__(self, x):
        return binarize(x, self.threshold)


if __name__ == "__main__":
    key = jax.random.PRNGKey(0)

    # Main test: NCHW (2, 4, 16, 16) f32 — numel is a multiple of 128 (aligned path).
    x = jax.random.uniform(key, (2, 4, 16, 16), dtype=jnp.float32)
    module = Binarize(threshold=0.5)
    out = jax.block_until_ready(module(x))
    ref = (x > 0.5).astype(jnp.float32)
    assert out.shape == x.shape
    assert out.dtype == jnp.float32
    assert bool(jnp.all(out == ref))

    # Native-dtype (bf16) path: compare happens in bf16 inside the kernel.
    x_bf16 = x.astype(jnp.bfloat16)
    out_bf16 = jax.block_until_ready(binarize(x_bf16, 0.5))
    ref_bf16 = (x_bf16 > 0.5).astype(jnp.float32)
    assert out_bf16.dtype == jnp.float32
    assert bool(jnp.all(out_bf16 == ref_bf16))

    # Larger input: exercises a multi-step grid (pipelined blocks).
    x_big = jax.random.uniform(jax.random.PRNGKey(2), (8, 64, 512), dtype=jnp.float32)
    out_big = jax.block_until_ready(binarize(x_big, 0.5))
    assert bool(jnp.all(out_big == (x_big > 0.5).astype(jnp.float32)))

    # Ragged-size path: numel not a multiple of 128 (kernel prefix + XLA tail).
    x_odd = jax.random.uniform(jax.random.PRNGKey(1), (3, 50, 7), dtype=jnp.float32)
    out_odd = jax.block_until_ready(binarize(x_odd, 0.25))
    ref_odd = (x_odd > 0.25).astype(jnp.float32)
    assert out_odd.shape == x_odd.shape
    assert bool(jnp.all(out_odd == ref_odd))

    # Tiny (<128 element) fallback path.
    x_tiny = jax.random.uniform(jax.random.PRNGKey(3), (3, 5, 7), dtype=jnp.float32)
    out_tiny = jax.block_until_ready(binarize(x_tiny, 0.25))
    assert bool(jnp.all(out_tiny == (x_tiny > 0.25).astype(jnp.float32)))

    # Straight-through backward (matches deepsvg binarize_fun.backward).
    g = jax.grad(lambda a: binarize(a, 0.5).sum())(x)
    assert g.shape == x.shape and g.dtype == x.dtype
    assert bool(jnp.all(g == 1.0))

    print("KERNEL_OK")
</pallas_src>

<mosaic_0001>
module attributes {stable_mosaic.version = 11 : i64} {
  func.func @_binarize_kernel(%arg0: i32, %arg1: memref<1x2048xf32, #tpu.memory_space<vmem>>, %arg2: memref<1x2048xf32, #tpu.memory_space<vmem>>) attributes {dimension_semantics = [#tpu.dimension_semantics<parallel>], iteration_bounds = array<i64: 1>, scalar_prefetch = 0 : i64, scratch_operands = 0 : i64, tpu.core_type = #tpu.core_type<tc>, window_params = [{transform_indices = @transform_0, window_bounds = array<i64: 1, 2048>}, {transform_indices = @transform_1, window_bounds = array<i64: 1, 2048>}]} {
    %c0 = arith.constant 0 : index
    %c0_0 = arith.constant 0 : index
    %0 = vector.load %arg1[%c0, %c0_0] : memref<1x2048xf32, #tpu.memory_space<vmem>>, vector<1x2048xf32>
    %cst = arith.constant 5.000000e-01 : f32
    %1 = vector.broadcast %cst : f32 to vector<1x2048xf32>
    %2 = arith.cmpf ogt, %0, %1 : vector<1x2048xf32>
    %3 = arith.extui %2 : vector<1x2048xi1> to vector<1x2048xi32>
    %4 = arith.sitofp %3 : vector<1x2048xi32> to vector<1x2048xf32>
    %c0_1 = arith.constant 0 : index
    %c0_2 = arith.constant 0 : index
    %5 = vector.load %arg2[%c0_1, %c0_2] : memref<1x2048xf32, #tpu.memory_space<vmem>>, vector<1x2048xf32>
    tpu.vector_store %arg2[%c0_1, %c0_2], %4 {strides = array<i32>} : memref<1x2048xf32, #tpu.memory_space<vmem>>, vector<1x2048xf32>,
    return
  }
  func.func @transform_0(%arg0: i32) -> (i32, i32) {
    %c0_i32 = arith.constant 0 : i32
    %c0_i32_0 = arith.constant 0 : i32
    return %arg0, %c0_i32 : i32, i32
  }
  func.func @transform_1(%arg0: i32) -> (i32, i32) {
    %c0_i32 = arith.constant 0 : i32
    %c0_i32_0 = arith.constant 0 : i32
    return %arg0, %c0_i32 : i32, i32
  }
}

</mosaic_0001>

<llo_original>
// kernel: _binarize_aligned.1
$region0: #{_binarize_aligned.1}
  #allocation0 [shape = 'u32[]', space=smem, size = 0x4, offset = 0x4, fixed_abs, tag = 'smem constant byte address 0x4 - core index']
  #allocation1 [shape = 'u32[72,128]{1,0:T(1,128)}', space=vmem, size = 0x9000, scoped, tag = 'internal scratch']
  %s0 = inlined_call_operand.hbm [shape: f32[1,2048], index: 0, kind: input, shape index: {}]
  %s1 = inlined_call_operand.hbm [shape: f32[1,2048], index: 1, kind: output, shape index: {}]
  %s2 = sld [smem:[#allocation0]]
  $region18: #{_binarize_aligned.1} parent=0
    _
  %s4 = ssub.s32 1, %s2
  %s5 = scalar_select 0, %s4, %s2
  $region1: #{_binarize_aligned.1} parent=0
    #allocation2 [shape = 'u8[8192]{0}', space=vmem, size = 0x2000, scoped, tag = 'input window, operand 0, single buffered']
    #allocation3 [shape = 's32[1]{0}', space=sflag, size = 0x4, scoped, tag = 'scoped memory for _binarize_aligned.1']
    #allocation4 [shape = 's32[1]{0}', space=sflag, size = 0x4, scoped, tag = 'scoped memory for _binarize_aligned.1']
    #allocation5 [shape = 'u8[8192]{0}', space=vmem, size = 0x2000, scoped, tag = 'output window, operand 0, single buffered']
    %6 = vsyncpa [#allocation3], 0
    %7 = vsyncpa [#allocation4], 0
    // Predicated region
    $region2: #{_binarize_aligned.1} parent=1 // pred_check
      _
    $region3: #{_binarize_aligned.1} parent=1 // pred_check_branch
      %9 = sbr.rel (0) target = $region5
    $region4: #{_binarize_aligned.1} parent=1 // pred_region
      %11 = vsyncadd [#allocation3], 0
      %s13 = sshll.u32 %s0, 4
      %s14 = int_to_ptr.hbm [resolvable:$true] %s13
      %s15 = sshll.u32 [#allocation2], 4
      %s16 = int_to_ptr.vmem [resolvable:$true] %s15
      %18 = dma.hbm_to_vmem [thread:$0]  %s14, 256, %s16, [#allocation3]
    $region5: #{_binarize_aligned.1} parent=1 // pred_fallthru
      _
    // Predicated region
    $region6: #{_binarize_aligned.1} parent=1 // pred_check
      _
    $region7: #{_binarize_aligned.1} parent=1 // pred_check_branch
      %20 = sbr.rel (0) target = $region9
    $region8: #{_binarize_aligned.1} parent=1 // pred_region
      %22 = dma.done [#allocation3], 256
    $region9: #{_binarize_aligned.1} parent=1 // pred_fallthru
      _
    %v23 = vld [vmem:[#allocation2] sm:$0xff]
    %v24 = vld [vmem:[#allocation2 + $0x8] sm:$0xff]
    %vm25 = vcmp.gt.f32.partialorder %v23, 0.5
    %vm26 = vcmp.gt.f32.partialorder %v24, 0.5
    %v27 = vsel %vm25, 1, 0
    %v28 = vsel %vm26, 1, 0
    %v29 = vcvt.s32.f32 %v27
    %v30 = vcvt.s32.f32 %v28
    %31 = vst [vmem:[#allocation5] sm:$0xff] %v29
    %32 = vst [vmem:[#allocation5 + $0x8] sm:$0xff] %v30
    // Predicated region
    $region10: #{_binarize_aligned.1} parent=1 // pred_check
      _
    $region11: #{_binarize_aligned.1} parent=1 // pred_check_branch
      %34 = sbr.rel (0) target = $region13
    $region12: #{_binarize_aligned.1} parent=1 // pred_region
      %36 = vsyncadd [#allocation4], 0
      %s38 = sshll.u32 [#allocation5], 4
      %s39 = int_to_ptr.vmem [resolvable:$true] %s38
      %s40 = sshll.u32 %s1, 4
      %s41 = int_to_ptr.hbm [resolvable:$true] %s40
      %43 = dma.vmem_to_hbm [thread:$0]  %s39, 256, %s41, [#allocation4]
    $region13: #{_binarize_aligned.1} parent=1 // pred_fallthru
      _
    // Predicated region
    $region14: #{_binarize_aligned.1} parent=1 // pred_check
      _
    $region15: #{_binarize_aligned.1} parent=1 // pred_check_branch
      %45 = sbr.rel (0) target = $region17
    $region16: #{_binarize_aligned.1} parent=1 // pred_region
      %47 = dma.done [#allocation4], 256
    $region17: #{_binarize_aligned.1} parent=1 // pred_fallthru
      _
    %48 = vsyncpa [#allocation3], 1
    %49 = vsyncpa [#allocation4], 1

</llo_original>
